<compile_context>
chip_gen: v7x
topology: tpu7x:2x2x1
jax: 0.10.0
libtpu: 0.0.40
codegen_flags: <defaults>
</compile_context>

<pallas_src>
import functools

import jax
import jax.numpy as jnp
from jax.experimental import pallas as pl
from jax.experimental.pallas import tpu as pltpu


_MIN_GRID_STEPS = 4  # keeps double-buffering busy + feeds both v7x TensorCores


def _rmsnorm_kernel(x_ref, w_ref, o_ref, *, eps):
    # x_ref: (block_rows, hidden), w_ref: (1, hidden) already fp32.
    # NOTE: in the ragged tail block the out-of-range rows hold unspecified
    # VMEM contents. This is benign because the reduction is strictly per-row
    # along the fully-resident hidden axis and the out-of-range output rows
    # are masked on store — any future change that reduces across rows (or
    # reuses the fp32 tile across grid steps) must re-examine this.
    x = x_ref[...].astype(jnp.float32)
    w = w_ref[...]
    mean_sq = jnp.mean(x * x, axis=-1, keepdims=True)
    inv_rms = jax.lax.rsqrt(mean_sq + eps)
    y = x * inv_rms * w  # broadcast (1, hidden) over rows
    o_ref[...] = y.astype(o_ref.dtype)


def _vmem_capacity_bytes():
    """Per-core VMEM capacity; conservative 64 MiB fallback if the query fails."""
    try:
        return int(pltpu.get_tpu_info().vmem_capacity_bytes)
    except Exception:  # e.g. interpret mode / non-TPU tracing
        return 64 * 1024 * 1024


def _choose_block_rows(n_rows, hidden, dtype, vmem_tile_budget):
    """Largest sublane-aligned row tile that fits the VMEM budget, then shrunk
    (pack-aligned) so the grid has at least _MIN_GRID_STEPS steps."""
    itemsize = jnp.dtype(dtype).itemsize
    # native packed sublane tile: 8 rows for 32-bit, 16 for 16-bit, 32 for 8-bit
    pack = {4: 8, 2: 16, 1: 32}.get(itemsize, 8)
    # per-row VMEM: double-buffered input + output tiles (2*in + 2*out) plus
    # ~3 fp32 intermediates of the tile (the fp32 cast of x stays live across
    # both the reduction and the rescale, plus y before the down-cast).
    bytes_per_row = hidden * (4 * itemsize + 3 * 4)

    if pack * bytes_per_row > vmem_tile_budget:
        # TODO(synk): tile the hidden axis with a partial-sum accumulator for
        # extremely large hidden sizes instead of raising.
        raise ValueError(
            f"hidden={hidden} is too large for the untiled-hidden RMSNorm "
            f"kernel ({pack * bytes_per_row} B needed > budget "
            f"{vmem_tile_budget} B)")

    block = max(pack, vmem_tile_budget // bytes_per_row)
    block = (block // pack) * pack
    # never larger than the (pack-rounded) number of rows actually present
    needed = ((n_rows + pack - 1) // pack) * pack
    block = min(block, needed)

    # Enforce a minimum grid depth so double-buffering can overlap DMA with
    # compute and so ("parallel",) semantics shard rows across both v7x TCs.
    if n_rows >= _MIN_GRID_STEPS * pack:
        steps = -(-n_rows // block)
        if steps < _MIN_GRID_STEPS:
            block = max(pack, (n_rows // (_MIN_GRID_STEPS * pack)) * pack)
        # Prefer an even step count (megacore load balance) when it is cheap.
        steps = -(-n_rows // block)
        if steps % 2 == 1 and n_rows >= (steps + 1) * pack:
            block_even = max(pack, (n_rows // ((steps + 1) * pack)) * pack)
            steps_even = -(-n_rows // block_even)
            if steps_even % 2 == 0 and steps_even <= steps + 2:
                block = block_even

    return max(block, pack)


def triton_rms_norm(hidden_states, weight, eps=1e-5, block_rows=None,
                    vmem_limit_bytes=None):
    """RMSNorm forward. hidden_states: (..., hidden), weight: (hidden,)."""
    orig_shape = hidden_states.shape
    hidden = orig_shape[-1]
    x2d = hidden_states.reshape(-1, hidden)
    n_rows = x2d.shape[0]
    dtype = hidden_states.dtype
    itemsize = jnp.dtype(dtype).itemsize

    capacity = _vmem_capacity_bytes()
    # ~0.35*capacity tile budget on 64 MiB parts (v7x), ~0.5*capacity on
    # 128 MiB parts (v5e/v6e); scoped limit at ~0.75*capacity everywhere.
    budget_frac = 0.35 if capacity <= 64 * 1024 * 1024 else 0.5
    vmem_tile_budget = int(budget_frac * capacity)
    if vmem_limit_bytes is None:
        vmem_limit_bytes = int(0.75 * capacity)

    if block_rows is None:
        block_rows = _choose_block_rows(n_rows, hidden, dtype, vmem_tile_budget)

    # Pre-cast weight to fp32 once (avoids a per-grid-step cast in-kernel).
    w2d = weight.astype(jnp.float32).reshape(1, hidden)

    kernel = functools.partial(_rmsnorm_kernel, eps=eps)

    # Advisory cost for XLA scheduling: read + write of the tensor, one rsqrt
    # per row, ~3 flops/element (square, reduce-add, scale).
    cost = pl.CostEstimate(
        flops=3 * n_rows * hidden,
        transcendentals=n_rows,
        bytes_accessed=2 * n_rows * hidden * itemsize + hidden * 4,
    )

    # NOTE: for very narrow hidden (<128 lanes) the output stores are masked;
    # real LLM hidden sizes (multiples of 128) are lane-dense and unaffected.
    out = pl.pallas_call(
        kernel,
        out_shape=jax.ShapeDtypeStruct((n_rows, hidden), dtype),
        grid_spec=pltpu.PrefetchScalarGridSpec(
            num_scalar_prefetch=0,
            grid=(pl.cdiv(n_rows, block_rows),),
            in_specs=[
                pl.BlockSpec((block_rows, hidden), lambda i: (i, 0)),
                pl.BlockSpec((1, hidden), lambda i: (0, 0)),
            ],
            out_specs=pl.BlockSpec((block_rows, hidden), lambda i: (i, 0)),
        ),
        compiler_params=pltpu.CompilerParams(
            dimension_semantics=("parallel",),
            vmem_limit_bytes=vmem_limit_bytes,
        ),
        cost_estimate=cost,
    )(x2d, w2d)

    return out.reshape(orig_shape)


if __name__ == "__main__":
    batch, seq, hidden = 2, 8, 32
    eps = 1e-5

    key = jax.random.PRNGKey(0)
    x = jax.random.normal(key, (batch, seq, hidden), dtype=jnp.float32)

    # Deterministic parameter init: weight = ones(hidden_size), bias = None
    weight = jnp.ones((hidden,), dtype=jnp.float32)

    y = triton_rms_norm(x, weight, eps=eps)
    y = jax.block_until_ready(y)

    # Pure-JAX reference check
    x32 = x.astype(jnp.float32)
    ref = (x32 * jax.lax.rsqrt(jnp.mean(x32 * x32, axis=-1, keepdims=True) + eps)
           * weight).astype(x.dtype)
    assert jnp.allclose(y, ref, atol=1e-5, rtol=1e-5), "mismatch vs reference"

    print("KERNEL_OK")
</pallas_src>

<mosaic_0001>
module attributes {stable_mosaic.version = 11 : i64} {
  func.func @_rmsnorm_kernel(%arg0: i32, %arg1: memref<16x32xf32, #tpu.memory_space<vmem>>, %arg2: memref<1x32xf32, #tpu.memory_space<vmem>>, %arg3: memref<16x32xf32, #tpu.memory_space<vmem>>) attributes {dimension_semantics = [#tpu.dimension_semantics<parallel>], iteration_bounds = array<i64: 1>, scalar_prefetch = 0 : i64, scratch_operands = 0 : i64, tpu.core_type = #tpu.core_type<tc>, window_params = [{transform_indices = @transform_0, window_bounds = array<i64: 16, 32>}, {pipeline_mode = #tpu.pipeline_mode<synchronous>, transform_indices = @transform_1, window_bounds = array<i64: 1, 32>}, {transform_indices = @transform_2, window_bounds = array<i64: 16, 32>}]} {
    %c0 = arith.constant 0 : index
    %c0_0 = arith.constant 0 : index
    %0 = vector.load %arg1[%c0, %c0_0] : memref<16x32xf32, #tpu.memory_space<vmem>>, vector<16x32xf32>
    %c0_1 = arith.constant 0 : index
    %c0_2 = arith.constant 0 : index
    %1 = vector.load %arg2[%c0_1, %c0_2] : memref<1x32xf32, #tpu.memory_space<vmem>>, vector<1x32xf32>
    %2 = arith.mulf %0, %0 : vector<16x32xf32>
    %cst = arith.constant dense<0.000000e+00> : vector<16xf32>
    %3 = vector.multi_reduction <add>, %2, %cst [1] : vector<16x32xf32> to vector<16xf32>
    %4 = vector.shape_cast %3 : vector<16xf32> to vector<16x1xf32>
    %cst_3 = arith.constant 3.200000e+01 : f32
    %5 = vector.broadcast %cst_3 : f32 to vector<16x1xf32>
    %6 = arith.divf %4, %5 : vector<16x1xf32>
    %cst_4 = arith.constant 9.99999974E-6 : f32
    %7 = vector.broadcast %cst_4 : f32 to vector<16x1xf32>
    %8 = arith.addf %6, %7 : vector<16x1xf32>
    %9 = math.rsqrt %8 : vector<16x1xf32>
    %10 = vector.broadcast %9 : vector<16x1xf32> to vector<16x32xf32>
    %11 = arith.mulf %0, %10 : vector<16x32xf32>
    %12 = vector.broadcast %1 : vector<1x32xf32> to vector<16x32xf32>
    %13 = arith.mulf %11, %12 : vector<16x32xf32>
    %c0_5 = arith.constant 0 : index
    %c0_6 = arith.constant 0 : index
    %14 = vector.load %arg3[%c0_5, %c0_6] : memref<16x32xf32, #tpu.memory_space<vmem>>, vector<16x32xf32>
    tpu.vector_store %arg3[%c0_5, %c0_6], %13 {strides = array<i32>} : memref<16x32xf32, #tpu.memory_space<vmem>>, vector<16x32xf32>,
    return
  }
  func.func @transform_0(%arg0: i32) -> (i32, i32) {
    %c0_i32 = arith.constant 0 : i32
    %c0_i32_0 = arith.constant 0 : i32
    return %arg0, %c0_i32 : i32, i32
  }
  func.func @transform_1(%arg0: i32) -> (i32, i32) {
    %c0_i32 = arith.constant 0 : i32
    %c0_i32_0 = arith.constant 0 : i32
    %c0_i32_1 = arith.constant 0 : i32
    return %c0_i32, %c0_i32_0 : i32, i32
  }
  func.func @transform_2(%arg0: i32) -> (i32, i32) {
    %c0_i32 = arith.constant 0 : i32
    %c0_i32_0 = arith.constant 0 : i32
    return %arg0, %c0_i32 : i32, i32
  }
}

</mosaic_0001>

<llo_original>
// kernel: tpu_custom_call.1
$region0: #{tpu_custom_call.1}
  #allocation0 [shape = 'u32[]', space=smem, size = 0x4, offset = 0x4, fixed_abs, tag = 'smem constant byte address 0x4 - core index']
  #allocation1 [shape = 'u32[144,128]{1,0:T(1,128)}', space=vmem, size = 0x12000, scoped, tag = 'internal scratch']
  %s0 = inlined_call_operand.hbm [shape: f32[16,32], index: 0, kind: input, shape index: {}]
  %s1 = inlined_call_operand.vmem [shape: f32[1,32], index: 1, kind: input, shape index: {}]
  %s2 = inlined_call_operand.hbm [shape: f32[16,32], index: 2, kind: output, shape index: {}]
  %s3 = sld [smem:[#allocation0]]
  $region22: #{tpu_custom_call.1} parent=0
    _
  %s5 = ssub.s32 1, %s3
  %s6 = scalar_select 0, %s5, %s3
  $region1: #{tpu_custom_call.1} parent=0
    #allocation2 [shape = 'u8[8192]{0}', space=vmem, size = 0x2000, scoped, tag = 'input window, operand 0, single buffered']
    #allocation3 [shape = 's32[1]{0}', space=sflag, size = 0x4, scoped, tag = 'scoped memory for tpu_custom_call.1']
    #allocation4 [shape = 's32[1]{0}', space=sflag, size = 0x4, scoped, tag = 'scoped memory for tpu_custom_call.1']
    #allocation5 [shape = 'u8[8192]{0}', space=vmem, size = 0x2000, scoped, tag = 'output window, operand 0, single buffered']
    %7 = vsyncpa [#allocation3], 0
    %8 = vsyncpa [#allocation4], 0
    // Predicated region
    $region2: #{tpu_custom_call.1} parent=1 // pred_check
      _
    $region3: #{tpu_custom_call.1} parent=1 // pred_check_branch
      %10 = sbr.rel (0) target = $region5
    $region4: #{tpu_custom_call.1} parent=1 // pred_region
      %s12 = ssub.s32 256, 256
      %13 = vsyncadd [#allocation3], %s12
      %s14 = sshll.u32 [#allocation2], 4
      %s15 = int_to_ptr.vmem [resolvable:$true] %s14
      %20 = dma.hbm_to_vmem [thread:$0]  %s0, 256, %s15, [#allocation3], 128, 128, 8
    $region5: #{tpu_custom_call.1} parent=1 // pred_fallthru
      _
    // Predicated region
    $region6: #{tpu_custom_call.1} parent=1 // pred_check
      _
    $region7: #{tpu_custom_call.1} parent=1 // pred_check_branch
      %22 = sbr.rel (0) target = $region9
    $region8: #{tpu_custom_call.1} parent=1 // pred_region
      _
    $region9: #{tpu_custom_call.1} parent=1 // pred_fallthru
      _
    // Predicated region
    $region10: #{tpu_custom_call.1} parent=1 // pred_check
      _
    $region11: #{tpu_custom_call.1} parent=1 // pred_check_branch
      %24 = sbr.rel (0) target = $region13
    $region12: #{tpu_custom_call.1} parent=1 // pred_region
      %25 = dma.done [#allocation3], 256
    $region13: #{tpu_custom_call.1} parent=1 // pred_fallthru
      _
    %v26 = vld [vmem:[#allocation2] sm:$0xff]
    %v27 = vld [vmem:[#allocation2 + $0x8] sm:$0xff]
    %v28 = vld [vmem:[%s1] sm:$0x1]
    %v29 = vmul.f32 %v26, %v26
    %v30 = vmul.f32 %v27, %v27
    %vm31 = vcmask 261120
    %v32 = vsel %vm31, %v29, 0.0
    %33 = vadd.xlane.f32.xlu0 %v32
    %v34 = vpop.xlane.xlu0 %33
    %v35 = vsel %vm31, %v30, 0.0
    %36 = vadd.xlane.f32.xlu0 %v35
    %v37 = vpop.xlane.xlu0 %36
    %v38 = vrcp.pop 32.0
    %v39 = vmul.f32 %v34, %v38
    %v40 = vmul.f32 %v37, %v38
    %v41 = vadd.f32 %v39, 1e-05
    %v42 = vadd.f32 %v40, 1e-05
    %v43 = vrsqrt.pop %v41
    %v44 = vrsqrt.pop %v42
    %v45 = vmul.f32 %v26, %v43
    %v46 = vmul.f32 %v27, %v44
    %v48 = vlaneseq
    %v49 = vshrl.u32 %v48, 7
    %v50 = vsub.s32 0, %v49
    %v51 = vrot.slane %v28, %v50
    %v53 = vmul.f32 %v45, %v51
    %v54 = vmul.f32 %v46, %v51
    %55 = vst.msk [vmem:[#allocation5] sm:$0xff] %vm31, %v53
    %56 = vst.msk [vmem:[#allocation5 + $0x8] sm:$0xff] %vm31, %v54
    // Predicated region
    $region14: #{tpu_custom_call.1} parent=1 // pred_check
      _
    $region15: #{tpu_custom_call.1} parent=1 // pred_check_branch
      %58 = sbr.rel (0) target = $region17
    $region16: #{tpu_custom_call.1} parent=1 // pred_region
      %s60 = ssub.s32 256, 256
      %61 = vsyncadd [#allocation4], %s60
      %s62 = sshll.u32 [#allocation5], 4
      %s63 = int_to_ptr.vmem [resolvable:$true] %s62
      %68 = dma.vmem_to_hbm [thread:$0]  %s63, 256, %s2, [#allocation4], 128, 128, 8
    $region17: #{tpu_custom_call.1} parent=1 // pred_fallthru
      _
    // Predicated region
    $region18: #{tpu_custom_call.1} parent=1 // pred_check
      _
    $region19: #{tpu_custom_call.1} parent=1 // pred_check_branch
      %70 = sbr.rel (0) target = $region21
    $region20: #{tpu_custom_call.1} parent=1 // pred_region
      %71 = dma.done [#allocation4], 256
    $region21: #{tpu_custom_call.1} parent=1 // pred_fallthru
      _
    %72 = vsyncpa [#allocation3], 1
    %73 = vsyncpa [#allocation4], 1

</llo_original>
